<compile_context>
chip_gen: v7x
topology: tpu7x:2x2x1
jax: 0.10.0
libtpu: 0.0.40
codegen_flags: <defaults>
</compile_context>

<pallas_src>
import functools

import jax
import jax.numpy as jnp
import numpy as np
from jax.experimental import pallas as pl
from jax.experimental.pallas import tpu as pltpu


# ----------------------------- Pallas kernel ------------------------------ #

def _mda_sims_kernel(x_ref, topk_ref, out_ref, *, unroll):
    """B queries per grid step.

    x_ref:    (B, M, d)  refined embeddings of the top-M candidates (source dtype)
    topk_ref: (B, 1, K)  int32 local indices of the top-K rows
    out_ref:  (B, 1, M)  f32 unpermuted similarity rows: sims[i] = X1max . x[i]
    """
    B, M, _ = x_ref.shape

    # Loop-invariant values hoisted out of the per-query body (review item #1:
    # JAX does not CSE broadcast_in_dim, so keep them outside the unrolled loop).
    row_ids = jax.lax.broadcasted_iota(jnp.int32, (M, 1), 0)      # (M, 1)
    neg = jnp.full((), -jnp.inf, dtype=x_ref.dtype)

    def body(b, carry):
        x = x_ref[b]                                              # (M, d)
        topk = topk_ref[b]                                        # (1, K) int32

        # mask[i] = (i is one of the top-K indices)  -- replaces the one-hot
        # gather matmul (review item #2): pure VPU work, no extra MXU pass.
        hit = (row_ids == topk).astype(jnp.int32)                 # (M, K)
        mask = jnp.sum(hit, axis=1, keepdims=True) > 0            # (M, 1)

        # Max-aggregated descriptor over the selected rows (max is exact in any
        # float dtype; out-of-range indices simply select nothing).
        x1max = jnp.max(jnp.where(mask, x, neg), axis=0, keepdims=True)   # (1, d)

        # Single MXU pass over x; accumulate in f32.
        sims = jax.lax.dot_general(                               # (1, M)
            x1max, x, (((1,), (1,)), ((), ())),
            preferred_element_type=jnp.float32)

        out_ref[b] = sims
        return carry

    jax.lax.fori_loop(0, B, body, 0, unroll=unroll)


def _pick_batch_and_vmem(q, M, d, itemsize, max_b=64):
    """Queries per grid step, sized from the chip's VMEM (v7x has 64 MiB/TC)."""
    try:
        info = pltpu.get_tpu_info()
        vmem_cap = int(getattr(info, "vmem_capacity_bytes", 64 << 20))
    except Exception:
        vmem_cap = 64 << 20
    vmem_limit = int(min(vmem_cap * 3 // 4, 100 << 20))
    headroom = 2 << 20                                   # compiler-internal scratch
    budget = max(vmem_limit - headroom, 1 << 20)
    # Per query, double-buffered once (no double counting, review item #4):
    #   x block  +  sublane-padded output row  +  lane-padded topk row.
    per_query = 2 * M * d * itemsize + 2 * 8 * max(M, 128) * 4 + 2 * 8 * 128 * 4
    b = max(1, min(max_b, budget // per_query))
    if b >= 8:
        b = (b // 8) * 8                                 # keep the block's leading dim tidy
    # >= 2 grid steps so the "parallel" axis spans both v7x TensorCores (item #6).
    b = int(max(1, min(b, (q + 1) // 2)))
    return b, vmem_limit


def _mda_sims_pallas(x_dba, pre, K):
    """Unpermuted similarity rows sims (q, M):  sims[a, i] = X1max[a] . x_dba[a, i]."""
    q, M, d = x_dba.shape
    K_eff = int(min(K, M))

    # Top-K local indices, streamed as a tiny (q, 1, K) int32 side input.
    topk = pre[:, :K_eff].astype(jnp.int32).reshape(q, 1, K_eff)

    B, vmem_limit = _pick_batch_and_vmem(q, M, d, x_dba.dtype.itemsize)
    grid = (pl.cdiv(q, B),)                              # no B collapse for awkward q (item #5)
    unroll = True if B <= 4 else 2                       # bound vreg pressure (item #10)

    out = pl.pallas_call(
        functools.partial(_mda_sims_kernel, unroll=unroll),
        out_shape=jax.ShapeDtypeStruct((q, 1, M), jnp.float32),
        grid_spec=pltpu.PrefetchScalarGridSpec(
            num_scalar_prefetch=0,
            grid=grid,
            in_specs=[
                pl.BlockSpec((B, M, d), lambda i: (i, 0, 0)),
                pl.BlockSpec((B, 1, K_eff), lambda i: (i, 0, 0)),
            ],
            out_specs=pl.BlockSpec((B, 1, M), lambda i: (i, 0, 0)),
        ),
        compiler_params=pltpu.CompilerParams(
            dimension_semantics=("parallel",),           # shard queries across TCs (v7x)
            vmem_limit_bytes=vmem_limit,
        ),
    )(x_dba, topk)
    return out.reshape(q, M)


def rerank_scores_pallas(x_dba, ranks_trans_1000_pre, ranks_value_trans_1000, K,
                         stream_dtype=None):
    """res_rerank (q, M) = (sorted_sims + X1max . x[pre[j]]) / 2.

    The (q, M) permutation of the score row (res[j] = sims[pre[j]]) is cheap JAX
    glue; the heavy work (streaming x_dba once, masked max-aggregation, the
    single similarity matmul) lives in the Pallas kernel.
    """
    pre = ranks_trans_1000_pre.astype(jnp.int32)
    if stream_dtype is not None and x_dba.dtype != stream_dtype:
        # Optional bf16 streaming: halves HBM bytes (item #8); accumulation stays f32.
        x_dba = x_dba.astype(stream_dtype)
    sims = _mda_sims_pallas(x_dba, pre, K)                       # (q, M), unpermuted
    res = jnp.take_along_axis(sims, pre, axis=1)                 # res[:, j] = sims[:, pre[j]]
    return (ranks_value_trans_1000.astype(jnp.float32) + res) * 0.5


# ----------------------------- Module wrapper ------------------------------ #

class RerankwMDA:
    """JAX/Pallas port of the PyTorch RerankwMDA module (no trainable weights)."""

    def __init__(self, M=400, K=9, beta=0.15, stream_dtype=None):
        self.M = M
        self.K = K + 1
        self.beta = beta
        self.stream_dtype = stream_dtype     # e.g. jnp.bfloat16 to halve HBM traffic

    def __call__(self, ranks, rerank_dba_final, res_top1000_dba,
                 ranks_trans_1000_pre, x_dba):
        # ranks:                (N, q) int
        # rerank_dba_final:     list of q arrays (M,) int  (global db indices)
        # res_top1000_dba:      (q, M) f32 similarities
        # ranks_trans_1000_pre: (q, M) int  local ranking within the M candidates
        # x_dba:                (q, M, d)   refined embeddings
        ranks_trans_1000 = jnp.stack(rerank_dba_final, axis=0)                 # (q, M)
        ranks_value_trans_1000 = -jnp.sort(-res_top1000_dba, axis=-1)          # (q, M) desc.
        # NOTE: the original code computes `ranks_value_trans * beta` but never
        # uses it downstream (dead code) -> intentionally omitted.

        res_rerank = rerank_scores_pallas(
            x_dba, ranks_trans_1000_pre, ranks_value_trans_1000, self.K,
            stream_dtype=self.stream_dtype)                                    # (q, M)

        # TODO(synk): descending argsort has no clean Pallas TPU primitive; done in plain JAX.
        res_rerank_ranks = jnp.argsort(-res_rerank, axis=-1)                   # (q, M)

        part1 = jnp.take_along_axis(ranks_trans_1000, res_rerank_ranks, axis=1)  # (q, M)
        ranks_transpose = jnp.transpose(ranks, (1, 0))[:, self.M:]               # (q, N-M)
        ranks_final = jnp.concatenate([part1, ranks_transpose], axis=1)           # (q, N)
        return jnp.transpose(ranks_final, (1, 0))                                 # (N, q)


# --------------------------- plain-JAX reference --------------------------- #

def _ref_scores(x_dba, pre, vals_sorted, K):
    q, M, d = x_dba.shape
    idx1 = jnp.broadcast_to(pre[:, :K, None], (q, K, d))
    idx2 = jnp.broadcast_to(pre[:, :, None], (q, M, d))
    X1 = jnp.take_along_axis(x_dba, idx1, axis=1)                 # (q, K, d)
    X2 = jnp.take_along_axis(x_dba, idx2, axis=1)                 # (q, M, d)
    X1m = jnp.max(X1, axis=1, keepdims=True)                      # (q, 1, d)
    res = jnp.sum(jnp.einsum('abc,adc->abd', X1m, X2), axis=1)    # (q, M)
    return (vals_sorted + res) / 2.0


# --------------------------------- main ------------------------------------ #

if __name__ == "__main__":
    q, N, M, K_arg, d = 2, 40, 16, 7, 32   # small shapes consistent with the forward
    key = jax.random.PRNGKey(0)
    k1, k2, k3, k4, k5 = jax.random.split(key, 5)

    x_dba = jax.random.normal(k1, (q, M, d), dtype=jnp.float32)
    res_top1000_dba = jax.random.normal(k2, (q, M), dtype=jnp.float32)
    ranks_trans_1000_pre = jnp.stack(
        [jax.random.permutation(jax.random.fold_in(k3, i), M) for i in range(q)]
    ).astype(jnp.int32)                                                        # (q, M)
    rerank_dba_final = [
        jax.random.permutation(jax.random.fold_in(k4, i), N)[:M].astype(jnp.int32)
        for i in range(q)
    ]                                                                          # list of (M,)
    ranks = jnp.stack(
        [jax.random.permutation(jax.random.fold_in(k5, i), N) for i in range(q)],
        axis=1,
    ).astype(jnp.int32)                                                        # (N, q)

    model = RerankwMDA(M=M, K=K_arg, beta=0.15)
    ranks_final = model(ranks, rerank_dba_final, res_top1000_dba,
                        ranks_trans_1000_pre, x_dba)
    ranks_final = jax.block_until_ready(ranks_final)
    assert ranks_final.shape == (N, q), ranks_final.shape

    # verify the Pallas hot path against the plain-JAX reference
    vals_sorted = -jnp.sort(-res_top1000_dba, axis=-1)
    res_kernel = jax.block_until_ready(
        rerank_scores_pallas(x_dba, ranks_trans_1000_pre, vals_sorted, K_arg + 1))
    res_ref = _ref_scores(x_dba, ranks_trans_1000_pre, vals_sorted, K_arg + 1)
    np.testing.assert_allclose(np.asarray(res_kernel), np.asarray(res_ref),
                               rtol=1e-4, atol=1e-4)

    print("KERNEL_OK")
</pallas_src>

<mosaic_0001>
module attributes {stable_mosaic.version = 11 : i64} {
  func.func @_mda_sims_kernel(%arg0: i32, %arg1: memref<1x16x32xf32, #tpu.memory_space<vmem>>, %arg2: memref<1x1x8xi32, #tpu.memory_space<vmem>>, %arg3: memref<1x1x16xf32, #tpu.memory_space<vmem>>) attributes {dimension_semantics = [#tpu.dimension_semantics<parallel>], iteration_bounds = array<i64: 2>, scalar_prefetch = 0 : i64, scratch_operands = 0 : i64, tpu.core_type = #tpu.core_type<tc>, window_params = [{transform_indices = @transform_0, window_bounds = array<i64: 1, 16, 32>}, {transform_indices = @transform_1, window_bounds = array<i64: 1, 1, 8>}, {transform_indices = @transform_2, window_bounds = array<i64: 1, 1, 16>}]} {
    %0 = tpu.iota {dimensions = array<i32: 0>} : vector<16x1xi32>
    %cst = arith.constant 0xFF800000 : f32
    %c0_i32 = arith.constant 0 : i32
    %1 = arith.index_cast %c0_i32 : i32 to index
    %c0 = arith.constant 0 : index
    %c0_0 = arith.constant 0 : index
    %2 = vector.load %arg1[%1, %c0, %c0_0] : memref<1x16x32xf32, #tpu.memory_space<vmem>>, vector<1x16x32xf32>
    %3 = vector.shape_cast %2 : vector<1x16x32xf32> to vector<16x32xf32>
    %4 = arith.index_cast %c0_i32 : i32 to index
    %c0_1 = arith.constant 0 : index
    %c0_2 = arith.constant 0 : index
    %5 = vector.load %arg2[%4, %c0_1, %c0_2] : memref<1x1x8xi32, #tpu.memory_space<vmem>>, vector<1x1x8xi32>
    %6 = vector.shape_cast %5 : vector<1x1x8xi32> to vector<1x8xi32>
    %7 = vector.broadcast %0 : vector<16x1xi32> to vector<16x8xi32>
    %8 = vector.broadcast %6 : vector<1x8xi32> to vector<16x8xi32>
    %9 = arith.cmpi eq, %7, %8 : vector<16x8xi32>
    %10 = arith.extui %9 : vector<16x8xi1> to vector<16x8xi32>
    %cst_3 = arith.constant dense<0> : vector<16xi32>
    %11 = vector.multi_reduction <add>, %10, %cst_3 [1] : vector<16x8xi32> to vector<16xi32>
    %12 = vector.shape_cast %11 : vector<16xi32> to vector<16x1xi32>
    %c0_i32_4 = arith.constant 0 : i32
    %13 = vector.broadcast %c0_i32_4 : i32 to vector<16x1xi32>
    %14 = arith.cmpi sgt, %12, %13 : vector<16x1xi32>
    %15 = vector.shape_cast %14 : vector<16x1xi1> to vector<16x1xi1>
    %16 = vector.broadcast %15 : vector<16x1xi1> to vector<16x32xi1>
    %17 = vector.broadcast %cst : f32 to vector<16x32xf32>
    %18 = arith.select %16, %3, %17 : vector<16x32xi1>, vector<16x32xf32>
    %cst_5 = arith.constant dense<0xFF800000> : vector<32xf32>
    %19 = vector.multi_reduction <maximumf>, %18, %cst_5 [0] : vector<16x32xf32> to vector<32xf32>
    %20 = vector.shape_cast %19 : vector<32xf32> to vector<1x32xf32>
    %cst_6 = arith.constant dense<0.000000e+00> : vector<1x16xf32>
    %21 = tpu.matmul %20, %3, %cst_6 {dimension_numbers = #tpu.dot_dimension_numbers<[1], [1], [0], [0], [0, 0, 1, 0], [], []>} : vector<1x32xf32>, vector<16x32xf32>, vector<1x16xf32> -> vector<1x16xf32>
    %22 = arith.index_cast %c0_i32 : i32 to index
    %c0_7 = arith.constant 0 : index
    %c0_8 = arith.constant 0 : index
    %23 = vector.load %arg3[%22, %c0_7, %c0_8] : memref<1x1x16xf32, #tpu.memory_space<vmem>>, vector<1x1x16xf32>
    %24 = vector.shape_cast %23 : vector<1x1x16xf32> to vector<1x16xf32>
    %25 = vector.shape_cast %21 : vector<1x16xf32> to vector<1x1x16xf32>
    tpu.vector_store %arg3[%22, %c0_7, %c0_8], %25 {strides = array<i32>} : memref<1x1x16xf32, #tpu.memory_space<vmem>>, vector<1x1x16xf32>,
    %c1_i32 = arith.constant 1 : i32
    return
  }
  func.func @transform_0(%arg0: i32) -> (i32, i32, i32) {
    %c0_i32 = arith.constant 0 : i32
    %c0_i32_0 = arith.constant 0 : i32
    %c0_i32_1 = arith.constant 0 : i32
    return %arg0, %c0_i32, %c0_i32_0 : i32, i32, i32
  }
  func.func @transform_1(%arg0: i32) -> (i32, i32, i32) {
    %c0_i32 = arith.constant 0 : i32
    %c0_i32_0 = arith.constant 0 : i32
    %c0_i32_1 = arith.constant 0 : i32
    return %arg0, %c0_i32, %c0_i32_0 : i32, i32, i32
  }
  func.func @transform_2(%arg0: i32) -> (i32, i32, i32) {
    %c0_i32 = arith.constant 0 : i32
    %c0_i32_0 = arith.constant 0 : i32
    %c0_i32_1 = arith.constant 0 : i32
    return %arg0, %c0_i32, %c0_i32_0 : i32, i32, i32
  }
}

</mosaic_0001>

<llo_original>
// kernel: tpu_custom_call.1
$region0: #{tpu_custom_call.1}
  #allocation0 [shape = 'u32[]', space=smem, size = 0x4, offset = 0x4, fixed_abs, tag = 'smem constant byte address 0x4 - core index']
  #allocation1 [shape = 'u32[144,128]{1,0:T(1,128)}', space=vmem, size = 0x12000, scoped, tag = 'internal scratch']
  %s0 = inlined_call_operand.hbm [shape: f32[2,16,32], index: 0, kind: input, shape index: {}]
  %s1 = inlined_call_operand.vmem [shape: s32[2,1,8], index: 1, kind: input, shape index: {}]
  %s2 = inlined_call_operand.hbm [shape: f32[2,1,16], index: 2, kind: output, shape index: {}]
  %s3 = sld [smem:[#allocation0]]
  $region45: #{tpu_custom_call.1} parent=0
    _
  %s5 = ssub.s32 1, %s3
  %s6 = scalar_select 0, %s5, %s3
  $region1: #{tpu_custom_call.1} parent=0
    #allocation2 [shape = 'u8[16384]{0}', space=vmem, size = 0x4000, scoped, tag = 'input window, operand 0']
    #allocation3 [shape = 's32[2]{0}', space=sflag, size = 0x8, scoped, tag = 'scoped memory for tpu_custom_call.1']
    #allocation4 [shape = 's32[2]{0}', space=sflag, size = 0x8, scoped, tag = 'scoped memory for tpu_custom_call.1']
    #allocation5 [shape = 'u8[1024]{0}', space=vmem, size = 0x400, scoped, tag = 'output window, operand 0']
    %7 = vsyncpa [#allocation3], 0
    %s8 = scalar_lea.sflag [#allocation3], 1
    %9 = vsyncpa %s8, 0
    %10 = vsyncpa [#allocation4], 0
    %s11 = scalar_lea.sflag [#allocation4], 1
    %12 = vsyncpa %s11, 0
    loop: start=0, step=1, limit=4
    $region2: #{tpu_custom_call.1} parent=1 // loop_pre_header
      _
    $region3: #{tpu_custom_call.1} parent=1 // loop_header
      %s14 = sphi 0, %s18
      %p15 = scmp.ge.s32.totalorder %s14, 4
      %s24 = sphi 0, %s26
      %s27 = sphi 0, %s24
      %s28 = sphi 0, %s27
      %s44 = sphi 0, %s28
      %s50 = sphi 0, %s52
      %s53 = sphi 0, %s50
      %s54 = sphi 0, %s53
      %s70 = sphi 0, %s54
      %s76 = sphi 0, %s78
      %s79 = sphi 0, %s76
      %s80 = sphi 0, %s79
      %s96 = sphi 0, %s80
    $region4: #{tpu_custom_call.1} parent=1 // loop_header_branch
      %17 = sbr.rel (%p15) target = $region8
    $region5: #{tpu_custom_call.1} parent=1 // loop_body
      %s19 = ssub.s32 %s14, 1
      %s20 = ssub.s32 %s14, 2
      %s21 = sadd.s32 %s14, 1
      %s22 = ssub.s32 %s14, %s21
      %p23 = scmp.eq.s32.totalorder %s22, 0
      %s25 = sadd.s32 %s24, 1
      %s26 = scalar_select %p23, %s24, %s25
      %p29 = pneg %p23
      %p30 = scmp.eq.s32.totalorder %s14, 1
      %p31 = por %p29, %p30
      %p32 = scmp.ne.s32.totalorder %s24, %s27
      %p33 = scmp.eq.s32.totalorder %s14, 0
      %p34 = por %p32, %p33
      %p35 = scmp.ne.s32.totalorder %s24, %s27
      %p36 = scmp.eq.s32.totalorder %s19, 1
      %p37 = por %p35, %p36
      %p38 = scmp.ne.s32.totalorder %s27, %s28
      %p39 = scmp.eq.s32.totalorder %s19, 0
      %p40 = por %p38, %p39
      %p41 = scmp.ne.s32.totalorder %s27, %s28
      %p42 = scmp.eq.s32.totalorder %s20, 1
      %p43 = por %p41, %p42
      %p45 = scmp.ne.s32.totalorder %s28, %s44
      %p46 = scmp.eq.s32.totalorder %s20, 0
      %p47 = por %p45, %p46
      %s48 = ssub.s32 %s14, %s21
      %p49 = scmp.eq.s32.totalorder %s48, 0
      %s51 = sadd.s32 %s50, 1
      %s52 = scalar_select %p49, %s50, %s51
      %p55 = pneg %p49
      %p56 = scmp.eq.s32.totalorder %s14, 1
      %p57 = por %p55, %p56
      %p58 = scmp.ne.s32.totalorder %s50, %s53
      %p59 = scmp.eq.s32.totalorder %s14, 0
      %p60 = por %p58, %p59
      %p61 = scmp.ne.s32.totalorder %s50, %s53
      %p62 = scmp.eq.s32.totalorder %s19, 1
      %p63 = por %p61, %p62
      %p64 = scmp.ne.s32.totalorder %s53, %s54
      %p65 = scmp.eq.s32.totalorder %s19, 0
      %p66 = por %p64, %p65
      %p67 = scmp.ne.s32.totalorder %s53, %s54
      %p68 = scmp.eq.s32.totalorder %s20, 1
      %p69 = por %p67, %p68
      %p71 = scmp.ne.s32.totalorder %s54, %s70
      %p72 = scmp.eq.s32.totalorder %s20, 0
      %p73 = por %p71, %p72
      %s74 = ssub.s32 %s14, %s21
      %p75 = scmp.eq.s32.totalorder %s74, 0
      %s77 = sadd.s32 %s76, 1
      %s78 = scalar_select %p75, %s76, %s77
      %p81 = pneg %p75
      %p82 = scmp.eq.s32.totalorder %s14, 1
      %p83 = por %p81, %p82
      %p84 = scmp.ne.s32.totalorder %s76, %s79
      %p85 = scmp.eq.s32.totalorder %s14, 0
      %p86 = por %p84, %p85
      %p87 = scmp.ne.s32.totalorder %s76, %s79
      %p88 = scmp.eq.s32.totalorder %s19, 1
      %p89 = por %p87, %p88
      %p90 = scmp.ne.s32.totalorder %s79, %s80
      %p91 = scmp.eq.s32.totalorder %s19, 0
      %p92 = por %p90, %p91
      %p93 = scmp.ne.s32.totalorder %s79, %s80
      %p94 = scmp.eq.s32.totalorder %s20, 1
      %p95 = por %p93, %p94
      %p97 = scmp.ne.s32.totalorder %s80, %s96
      %p98 = scmp.eq.s32.totalorder %s20, 0
      %p99 = por %p97, %p98
      %p100 = scmp.le.s32.totalorder 1, %s14
      %p101 = scmp.lt.s32.totalorder %s14, 3
      %p102 = pnand %p100, %p101
      %p103 = pneg %p102
      // Predicated region
      $region9: #{tpu_custom_call.1} parent=5 // pred_check
        _
      $region10: #{tpu_custom_call.1} parent=5 // pred_check_branch
        %105 = sbr.rel (%p102) target = $region12
      $region11: #{tpu_custom_call.1} parent=5 // pred_region
        %s106 = ssub.s32 %s14, 1
      $region12: #{tpu_custom_call.1} parent=5 // pred_fallthru
        _
      %p107 = scmp.lt.s32.totalorder %s14, 2
      // Predicated region
      $region13: #{tpu_custom_call.1} parent=5 // pred_check
        %p108 = pneg %p107
      $region14: #{tpu_custom_call.1} parent=5 // pred_check_branch
        %110 = sbr.rel (%p108) target = $region16
      $region15: #{tpu_custom_call.1} parent=5 // pred_region
        // Predicated region
        $region17: #{tpu_custom_call.1} parent=15 // pred_check
          %p111 = pneg %p34
        $region18: #{tpu_custom_call.1} parent=15 // pred_check_branch
          %113 = sbr.rel (%p111) target = $region20
        $region19: #{tpu_custom_call.1} parent=15 // pred_region
          %s114 = sand.u32 %s24, 1
          %s115 = scalar_lea.sflag [#allocation3], %s114
          %s116 = sand.u32 %s24, 1
          %s117 = smul.addr %s116, 16
          %s118 = scalar_lea.vmem [#allocation2], %s117
          %s120 = ssub.s32 256, 256
          %121 = vsyncadd %s115, %s120
          %s122 = smul.addr %s14, 2
          %s123 = smul.addr %s122, 128
          %s124 = scalar_lea.hbm %s0, %s123
          %s125 = sshll.u32 %s118, 4
          %s126 = int_to_ptr.vmem [resolvable:$true] %s125
          %131 = dma.hbm_to_vmem [thread:$0]  %s124, 256, %s126, %s115, 128, 128, 8
        $region20: #{tpu_custom_call.1} parent=15 // pred_fallthru
          _
        // Predicated region
        $region21: #{tpu_custom_call.1} parent=15 // pred_check
          %p132 = pneg %p60
        $region22: #{tpu_custom_call.1} parent=15 // pred_check_branch
          %134 = sbr.rel (%p132) target = $region24
        $region23: #{tpu_custom_call.1} parent=15 // pred_region
          %p135 = scmp.lt.s32.totalorder %s14, 1
          %s136 = scalar_select %p135, %s14, 1
          %s137 = scalar_lea.vmem %s1, %s136
        $region24: #{tpu_custom_call.1} parent=15 // pred_fallthru
          _
      $region16: #{tpu_custom_call.1} parent=5 // pred_fallthru
        _
      %p138 = scmp.le.s32.totalorder 1, %s14
      %p139 = scmp.lt.s32.totalorder %s14, 3
      %p140 = pnand %p138, %p139
      %p141 = pneg %p140
      // Predicated region
      $region25: #{tpu_custom_call.1} parent=5 // pred_check
        _
      $region26: #{tpu_custom_call.1} parent=5 // pred_check_branch
        %143 = sbr.rel (%p140) target = $region28
      $region27: #{tpu_custom_call.1} parent=5 // pred_region
        %s144 = ssub.s32 %s14, 1
        %s145 = sand.u32 %s27, 1
        %s146 = scalar_lea.sflag [#allocation3], %s145
        %s147 = sand.u32 %s27, 1
        %s148 = smul.addr %s147, 16
        %s149 = scalar_lea.vmem [#allocation2], %s148
        // Predicated region
        $region29: #{tpu_custom_call.1} parent=27 // pred_check
          %p150 = pneg %p40
        $region30: #{tpu_custom_call.1} parent=27 // pred_check_branch
          %152 = sbr.rel (%p150) target = $region32
        $region31: #{tpu_custom_call.1} parent=27 // pred_region
          %153 = dma.done %s146, 256
        $region32: #{tpu_custom_call.1} parent=27 // pred_fallthru
          _
        %s154 = sand.u32 %s27, 1
        %s155 = scalar_lea.sflag [#allocation3], %s154
        %s156 = sand.u32 %s27, 1
        %s157 = smul.addr %s156, 16
        %s158 = scalar_lea.vmem [#allocation2], %s157
        %p159 = pneg %p40
        %p160 = pneg %p37
        %p161 = scmp.lt.s32.totalorder %s19, 1
        %s162 = scalar_select %p161, %s19, 1
        %s163 = scalar_lea.vmem %s1, %s162
        %p164 = pneg %p66
        %p165 = pneg %p63
        %p166 = pneg %p92
        %p167 = pneg %p89
        %s168 = sand.u32 %s79, 1
        %s169 = scalar_lea.sflag [#allocation4], %s168
        %s170 = sand.u32 %s79, 1
        %s171 = scalar_lea.vmem [#allocation5], %s170
        %p172 = scmp.lt.s32.totalorder %s19, 1
        %s173 = scalar_select %p172, %s19, 1
        %s174 = scalar_lea.vmem %s1, %s173
        %v175 = vlaneseq
        %v176 = vshrl.u32 %v175, 7
        %v177 = vadd.s32 %v176, 8
        %v178 = vld [vmem:[%s149] sm:$0xff]
        %v179 = vld [vmem:[%s149 + $0x8] sm:$0xff]
        %v180 = vld [vmem:[%s174] sm:$0x1]
        %v181 = vlaneseq
        %v182 = vshrl.u32 %v181, 7
        %v183 = vsub.s32 0, %v182
        %v184 = vrot.slane %v180, %v183
        %vm185 = vcmp.eq.s32.totalorder %v176, %v184
        %vm186 = vcmp.eq.s32.totalorder %v177, %v184
        %v187 = vsel %vm185, 1, 0
        %v188 = vsel %vm186, 1, 0
        %vm189 = vcmask 64512
        %v190 = vsel %vm189, %v187, 0
        %v191 = vand.u32 %v190, 65535
        %v192 = vshrl.u32 %v190, 16
        %v193 = vcvt.s32.f32 %v191
        %v194 = vcvt.s32.f32 %v192
        %195 = vadd.xlane.f32.xlu0 %v193
        %v196 = vpop.xlane.xlu0 %195
        %197 = vadd.xlane.f32.xlu0 %v194
        %v198 = vpop.xlane.xlu0 %197
        %v199 = vcvt.f32.s32 %v196
        %v200 = vcvt.f32.s32 %v198
        %v201 = vshll.u32 %v200, 16
        %v202 = vadd.s32 %v201, %v199
        %v203 = vsel %vm189, %v188, 0
        %v204 = vand.u32 %v203, 65535
        %v205 = vshrl.u32 %v203, 16
        %v206 = vcvt.s32.f32 %v204
        %v207 = vcvt.s32.f32 %v205
        %208 = vadd.xlane.f32.xlu0 %v206
        %v209 = vpop.xlane.xlu0 %208
        %210 = vadd.xlane.f32.xlu0 %v207
        %v211 = vpop.xlane.xlu0 %210
        %v212 = vcvt.f32.s32 %v209
        %v213 = vcvt.f32.s32 %v211
        %v214 = vshll.u32 %v213, 16
        %v215 = vadd.s32 %v214, %v212
        %vm216 = vcmp.gt.s32.totalorder %v202, 0
        %vm217 = vcmp.gt.s32.totalorder %v215, 0
        %v218 = vsel %vm216, 1, 0
        %v219 = vsel %vm217, 1, 0
        %vm220 = vcmp.eq.s32.totalorder %v218, 1
        %vm221 = vcmp.eq.s32.totalorder %v219, 1
        %v222 = vsel %vm220, %v178, -inf
        %v223 = vsel %vm221, %v179, -inf
        %vm224 = vcmask 261120
        %v225 = vsel %vm224, %v222, -inf
        %v226 = vsel %vm224, %v223, -inf
        %v227 = vmax.f32 %v225, %v226
        %v228 = vrot.slane %v227, 4
        %v229 = vmax.f32 %v227, %v228
        %v230 = vrot.slane %v229, 2
        %v231 = vmax.f32 %v229, %v230
        %v232 = vrot.slane %v231, 1
        %v233 = vmax.f32 %v231, %v232
        %v235 = vsel %vm224, %v233, 0
        %v238 = vsel %vm224, %v178, 0
        %v241 = vsel %vm224, %v179, 0
        %243 = vmatprep.subr.mxu0 0.0
        %244 = vmatpush1.xpose.msra.mxu0 %v238
        %245 = vmatprep.subr.mxu0 0.0
        %246 = vmatpush1.xpose.msra.mxu0 %v241
        %247 = vmatprep.subr.mxu0 0.0
        %248 = vmatpush1.xpose.msra.mxu0 0.0
        %249 = vmatprep.subr.mxu0 0.0
        %250 = vmatpush1.xpose.msra.mxu0 0.0
        %251 = vmatprep.subr.mxu0 0.0
        %252 = vmatpush1.xpose.msra.mxu0 0.0
        %253 = vmatprep.subr.mxu0 0.0
        %254 = vmatpush1.xpose.msra.mxu0 0.0
        %255 = vmatprep.subr.mxu0 0.0
        %256 = vmatpush1.xpose.msra.mxu0 0.0
        %257 = vmatprep.subr.mxu0 0.0
        %258 = vmatpush1.xpose.msra.mxu0 0.0
        %259 = vmatprep.subr.mxu0 0.0
        %260 = vmatpush1.xpose.msra.mxu0 0.0
        %261 = vmatprep.subr.mxu0 0.0
        %262 = vmatpush1.xpose.msra.mxu0 0.0
        %263 = vmatprep.subr.mxu0 0.0
        %264 = vmatpush1.xpose.msra.mxu0 0.0
        %265 = vmatprep.subr.mxu0 0.0
        %266 = vmatpush1.xpose.msra.mxu0 0.0
        %267 = vmatprep.subr.mxu0 0.0
        %268 = vmatpush1.xpose.msra.mxu0 0.0
        %269 = vmatprep.subr.mxu0 0.0
        %270 = vmatpush1.xpose.msra.mxu0 0.0
        %271 = vmatprep.subr.mxu0 0.0
        %272 = vmatpush1.xpose.msra.mxu0 0.0
        %273 = vmatprep.subr.mxu0 0.0
        %274 = vmatpush1.xpose.msra.mxu0 0.0
        %275 = vmatprep.subr.mxu0 0.0
        %276 = vmatpush1.xpose.msra.mxu0 0.0
        %277 = vmatprep.subr.mxu0 0.0
        %278 = vmatpush1.xpose.msra.mxu0 0.0
        %279 = vmatprep.subr.mxu0 0.0
        %280 = vmatpush1.xpose.msra.mxu0 0.0
        %281 = vmatprep.subr.mxu0 0.0
        %282 = vmatpush1.xpose.msra.mxu0 0.0
        %283 = vmatprep.subr.mxu0 0.0
        %284 = vmatpush1.xpose.msra.mxu0 0.0
        %285 = vmatprep.subr.mxu0 0.0
        %286 = vmatpush1.xpose.msra.mxu0 0.0
        %287 = vmatprep.subr.mxu0 0.0
        %288 = vmatpush1.xpose.msra.mxu0 0.0
        %289 = vmatprep.subr.mxu0 0.0
        %290 = vmatpush1.xpose.msra.mxu0 0.0
        %291 = vmatprep.subr.mxu0 0.0
        %292 = vmatpush1.xpose.msra.mxu0 0.0
        %293 = vmatprep.subr.mxu0 0.0
        %294 = vmatpush1.xpose.msra.mxu0 0.0
        %295 = vmatprep.subr.mxu0 0.0
        %296 = vmatpush1.xpose.msra.mxu0 0.0
        %297 = vmatprep.subr.mxu0 0.0
        %298 = vmatpush1.xpose.msra.mxu0 0.0
        %299 = vmatprep.subr.mxu0 0.0
        %300 = vmatpush1.xpose.msra.mxu0 0.0
        %301 = vmatprep.subr.mxu0 0.0
        %302 = vmatpush1.xpose.msra.mxu0 0.0
        %303 = vmatprep.subr.mxu0 0.0
        %304 = vmatpush1.xpose.msra.mxu0 0.0
        %305 = vmatprep.subr.mxu0 0.0
        %306 = vmatpush1.xpose.msra.mxu0 0.0
        %307 = vmatprep.mubr.f32.mxu0 0.0
        %308 = vmatmul.mubr.f32.gmra.mrb[0].mxu0 %v235
        %v309 = vpop.f32.mrb[0].mxu0
        %v310 = vadd.f32 0.0, %v309
        %v311 = vpop.f32.mrb[0].mxu0
        %312 = vdwg.mxu0
        %vm313 = vcmask 122880
        %314 = vst.msk [vmem:[%s171] sm:$0x1] %vm313, %v310
        %s315 = sand.u32 %s79, 1
        %s316 = scalar_lea.sflag [#allocation4], %s315
        %s317 = sand.u32 %s79, 1
        %s318 = scalar_lea.vmem [#allocation5], %s317
        // Predicated region
        $region33: #{tpu_custom_call.1} parent=27 // pred_check
          %p319 = pneg %p89
        $region34: #{tpu_custom_call.1} parent=27 // pred_check_branch
          %321 = sbr.rel (%p319) target = $region36
        $region35: #{tpu_custom_call.1} parent=27 // pred_region
          %s323 = ssub.s32 16, 16
          %324 = vsyncadd %s316, %s323
          %s325 = smul.addr %s19, 16
          %s326 = scalar_lea.hbm %s2, %s325
          %s328 = sshll.u32 %s318, 4
          %s329 = int_to_ptr.vmem [resolvable:$true] %s328
          %331 = dma.vmem_to_hbm [thread:$0]  %s329, 16, %s326, %s316
        $region36: #{tpu_custom_call.1} parent=27 // pred_fallthru
          _
      $region28: #{tpu_custom_call.1} parent=5 // pred_fallthru
        _
      %p332 = scmp.le.s32.totalorder 2, %s14
      // Predicated region
      $region37: #{tpu_custom_call.1} parent=5 // pred_check
        %p333 = pneg %p332
      $region38: #{tpu_custom_call.1} parent=5 // pred_check_branch
        %335 = sbr.rel (%p333) target = $region40
      $region39: #{tpu_custom_call.1} parent=5 // pred_region
        %s336 = ssub.s32 %s14, 2
        // Predicated region
        $region41: #{tpu_custom_call.1} parent=39 // pred_check
          %p337 = pneg %p95
        $region42: #{tpu_custom_call.1} parent=39 // pred_check_branch
          %339 = sbr.rel (%p337) target = $region44
        $region43: #{tpu_custom_call.1} parent=39 // pred_region
          %s340 = sand.u32 %s80, 1
          %s341 = scalar_lea.sflag [#allocation4], %s340
          %s342 = sand.u32 %s80, 1
          %s343 = scalar_lea.vmem [#allocation5], %s342
          %344 = dma.done %s341, 16
        $region44: #{tpu_custom_call.1} parent=39 // pred_fallthru
          _
      $region40: #{tpu_custom_call.1} parent=5 // pred_fallthru
        _
    $region6: #{tpu_custom_call.1} parent=1 // loop_footer
      %s18 = sadd.s32 1, %s14
    $region7: #{tpu_custom_call.1} parent=1 // loop_footer_branch
      %13 = sbr.rel target = $region3
    $region8: #{tpu_custom_call.1} parent=1 // loop_exit
      _
    %345 = vsyncpa [#allocation3], 1
    %s346 = scalar_lea.sflag [#allocation3], 1
    %347 = vsyncpa %s346, 1
    %348 = vsyncpa [#allocation4], 1
    %s349 = scalar_lea.sflag [#allocation4], 1
    %350 = vsyncpa %s349, 1

</llo_original>
